<compile_context>
chip_gen: v7x
topology: tpu7x:2x2x1
jax: 0.10.0
libtpu: 0.0.40
codegen_flags: <defaults>
</compile_context>

<pallas_src>
import jax
import jax.numpy as jnp
from jax import lax
from jax.experimental import pallas as pl
from jax.experimental.pallas import tpu as pltpu


# ----------------------------- Pallas kernel ----------------------------------

def fused_attention_head_kernel(x_ref, wqkv_ref, wo_ref, bo_ref, o_ref, attn_ref):
    """One grid step == one (batch, head) pair. Output block accumulated over heads."""
    h = pl.program_id(1)

    x = x_ref[0]                                               # (N, dim) bf16

    # Per-head Q/K/V projection (scale pre-folded into Wq). bf16 operands,
    # f32 accumulation on the MXU.
    q = jnp.dot(x, wqkv_ref[0, 0], preferred_element_type=jnp.float32)   # (N, D)
    k = jnp.dot(x, wqkv_ref[0, 1], preferred_element_type=jnp.float32)   # (N, D)
    v = jnp.dot(x, wqkv_ref[0, 2], preferred_element_type=jnp.float32)   # (N, D)

    # scores = q @ k^T : contraction expressed directly (no materialized k.T)
    dots = lax.dot_general(q.astype(jnp.bfloat16), k.astype(jnp.bfloat16),
                           (((1,), (1,)), ((), ())),
                           preferred_element_type=jnp.float32)            # (N, N)

    # Numerically-stable softmax, all elementwise math in f32.
    # Reciprocal on the EUP + one Newton step (near-exact, off the VPU divide path).
    m = jnp.max(dots, axis=-1, keepdims=True)
    p = jnp.exp(dots - m)
    s = jnp.sum(p, axis=-1, keepdims=True)
    r = pl.reciprocal(s, approx=True)
    r = r * (2.0 - s * r)
    a = p * r                                                             # (N, N) f32

    attn_ref[0, 0] = a

    # context_h = attn_h @ V_h, then per-head slice of the output projection.
    ctx = jnp.dot(a.astype(jnp.bfloat16), v.astype(jnp.bfloat16),
                  preferred_element_type=jnp.float32)                     # (N, D)
    contrib = jnp.dot(ctx.astype(jnp.bfloat16), wo_ref[0],
                      preferred_element_type=jnp.float32)                 # (N, dim)

    @pl.when(h == 0)
    def _():
        o_ref[0] = bo_ref[...] + contrib          # bias (1, dim) broadcasts

    @pl.when(h != 0)
    def _():
        o_ref[0] = o_ref[0] + contrib


# ----------------------------- Module wrapper ---------------------------------

def init_attention_params(key, dim, heads, dim_head):
    """Deterministic init mimicking nn.Linear default U(-1/sqrt(fan_in), +)."""
    inner_dim = heads * dim_head
    k1, k2, k3, k4, k5 = jax.random.split(key, 5)

    def lin_w(k, fan_in, fan_out):
        bound = 1.0 / jnp.sqrt(fan_in)
        # stored as (fan_in, fan_out) so kernels compute x @ w
        return jax.random.uniform(k, (fan_in, fan_out), jnp.float32, -bound, bound)

    params = {
        "wq": lin_w(k1, dim, inner_dim),
        "wk": lin_w(k2, dim, inner_dim),
        "wv": lin_w(k3, dim, inner_dim),
        "wo": lin_w(k4, inner_dim, dim),
        "bo": jax.random.uniform(
            k5, (1, dim), jnp.float32,
            -1.0 / jnp.sqrt(inner_dim), 1.0 / jnp.sqrt(inner_dim)),
    }
    return params


def attention_forward(x, params, heads, dim_head):
    """Equivalent of NewAttention.forward(x, ..., context=None, mask=None).

    Returns (out (B, N, dim) f32, attn (B, H, N, N) f32)."""
    B, N, dim = x.shape
    D = dim_head
    scale = D ** (-0.5)

    # Per-head weight packing (done once in the wrapper, outside the kernel):
    #   w_qkv[h] = [Wq_h * scale, Wk_h, Wv_h]  stacked on a leading axis so the
    #   kernel only slices on leading axes (no 64-lane-offset lane relayouts).
    def per_head(w):                                  # (dim, heads*D) -> (heads, dim, D)
        return w.reshape(dim, heads, D).transpose(1, 0, 2)

    w_qkv = jnp.stack(
        [per_head(params["wq"] * scale), per_head(params["wk"]), per_head(params["wv"])],
        axis=1).astype(jnp.bfloat16)                  # (heads, 3, dim, D)
    w_o = params["wo"].reshape(heads, D, dim).astype(jnp.bfloat16)  # (heads, D, dim)
    b_o = params["bo"].astype(jnp.float32)            # (1, dim)
    x_bf = x.astype(jnp.bfloat16)

    # VMEM budget: double-buffered blocks actually used per grid step (+ headroom).
    bytes_per_step = (N * dim * 2            # x (bf16)
                      + 3 * dim * D * 2      # per-head Wqkv (bf16)
                      + D * dim * 2          # per-head Wo (bf16)
                      + dim * 4              # bias (f32)
                      + N * dim * 4          # out block (f32)
                      + N * N * 4)           # attn block (f32)
    vmem_limit = int(min(100 * 2**20, max(8 * 2**20, 4 * bytes_per_step)))

    out, attn = pl.pallas_call(
        fused_attention_head_kernel,
        out_shape=(
            jax.ShapeDtypeStruct((B, N, dim), jnp.float32),
            jax.ShapeDtypeStruct((B, heads, N, N), jnp.float32),
        ),
        grid_spec=pltpu.PrefetchScalarGridSpec(
            num_scalar_prefetch=0,
            grid=(B, heads),
            in_specs=[
                pl.BlockSpec((1, N, dim), lambda b, h: (b, 0, 0)),        # x
                pl.BlockSpec((1, 3, dim, D), lambda b, h: (h, 0, 0, 0)),  # Wqkv per head
                pl.BlockSpec((1, D, dim), lambda b, h: (h, 0, 0)),        # Wo per head
                pl.BlockSpec((1, dim), lambda b, h: (0, 0)),              # bo
            ],
            out_specs=(
                pl.BlockSpec((1, N, dim), lambda b, h: (b, 0, 0)),        # out (accum over h)
                pl.BlockSpec((1, 1, N, N), lambda b, h: (b, h, 0, 0)),    # attn per head
            ),
        ),
        compiler_params=pltpu.CompilerParams(
            dimension_semantics=("parallel", "arbitrary"),
            vmem_limit_bytes=vmem_limit),
    )(x_bf, w_qkv, w_o, b_o)
    return out, attn


# ----------------------------- Reference (pure JAX, f32) -----------------------

def attention_reference(x, params, heads, dim_head):
    B, N, dim = x.shape
    scale = dim_head ** (-0.5)
    q = (x.reshape(B * N, dim) @ params["wq"]).reshape(B, N, heads, dim_head).transpose(0, 2, 1, 3)
    k = (x.reshape(B * N, dim) @ params["wk"]).reshape(B, N, heads, dim_head).transpose(0, 2, 1, 3)
    v = (x.reshape(B * N, dim) @ params["wv"]).reshape(B, N, heads, dim_head).transpose(0, 2, 1, 3)
    dots = jnp.einsum("bhid,bhjd->bhij", q, k) * scale
    attn = jax.nn.softmax(dots, axis=-1)
    out = jnp.einsum("bhij,bhjd->bhid", attn, v)
    out = out.transpose(0, 2, 1, 3).reshape(B * N, heads * dim_head)
    out = out @ params["wo"] + params["bo"]
    return out.reshape(B, N, dim), attn


# ----------------------------- Main -------------------------------------------

if __name__ == "__main__":
    B, N, dim = 2, 8, 32
    heads, dim_head = 8, 64  # module defaults

    key = jax.random.PRNGKey(0)
    kx, kp = jax.random.split(key)
    x = jax.random.normal(kx, (B, N, dim), dtype=jnp.float32)
    params = init_attention_params(kp, dim, heads, dim_head)

    out, attn = attention_forward(x, params, heads, dim_head)
    out = jax.block_until_ready(out)
    attn = jax.block_until_ready(attn)

    out_ref, attn_ref = attention_reference(x, params, heads, dim_head)

    assert out.shape == (B, N, dim)
    assert attn.shape == (B, heads, N, N)
    # bf16 MXU operands (f32 accumulate) => compare against the f32 reference
    # at bf16-appropriate tolerances.
    assert jnp.allclose(out, out_ref, atol=3e-2, rtol=3e-2)
    assert jnp.allclose(attn, attn_ref, atol=2e-2, rtol=2e-2)

    print("KERNEL_OK")
</pallas_src>

<mosaic_0001>
module attributes {stable_mosaic.version = 11 : i64} {
  func.func @fused_attention_head_kernel(%arg0: i32, %arg1: i32, %arg2: memref<1x8x32xbf16, #tpu.memory_space<vmem>>, %arg3: memref<1x3x32x64xbf16, #tpu.memory_space<vmem>>, %arg4: memref<1x64x32xbf16, #tpu.memory_space<vmem>>, %arg5: memref<1x32xf32, #tpu.memory_space<vmem>>, %arg6: memref<1x8x32xf32, #tpu.memory_space<vmem>>, %arg7: memref<1x1x8x8xf32, #tpu.memory_space<vmem>>) attributes {dimension_semantics = [#tpu.dimension_semantics<parallel>, #tpu.dimension_semantics<arbitrary>], iteration_bounds = array<i64: 2, 8>, scalar_prefetch = 0 : i64, scratch_operands = 0 : i64, tpu.core_type = #tpu.core_type<tc>, window_params = [{transform_indices = @transform_0, window_bounds = array<i64: 1, 8, 32>}, {transform_indices = @transform_1, window_bounds = array<i64: 1, 3, 32, 64>}, {transform_indices = @transform_2, window_bounds = array<i64: 1, 64, 32>}, {pipeline_mode = #tpu.pipeline_mode<synchronous>, transform_indices = @transform_3, window_bounds = array<i64: 1, 32>}, {transform_indices = @transform_4, window_bounds = array<i64: 1, 8, 32>}, {transform_indices = @transform_5, window_bounds = array<i64: 1, 1, 8, 8>}]} {
    %c0 = arith.constant 0 : index
    %c0_0 = arith.constant 0 : index
    %c0_1 = arith.constant 0 : index
    %0 = vector.load %arg2[%c0, %c0_0, %c0_1] : memref<1x8x32xbf16, #tpu.memory_space<vmem>>, vector<1x8x32xbf16>
    %1 = vector.shape_cast %0 : vector<1x8x32xbf16> to vector<8x32xbf16>
    %c0_2 = arith.constant 0 : index
    %c0_3 = arith.constant 0 : index
    %c0_4 = arith.constant 0 : index
    %c0_5 = arith.constant 0 : index
    %2 = vector.load %arg3[%c0_2, %c0_3, %c0_4, %c0_5] : memref<1x3x32x64xbf16, #tpu.memory_space<vmem>>, vector<1x1x32x64xbf16>
    %3 = vector.shape_cast %2 : vector<1x1x32x64xbf16> to vector<32x64xbf16>
    %cst = arith.constant dense<0.000000e+00> : vector<8x64xf32>
    %4 = tpu.matmul %1, %3, %cst {dimension_numbers = #tpu.dot_dimension_numbers<[1], [0], [0], [1], [0, 0, 1, 1], [], []>} : vector<8x32xbf16>, vector<32x64xbf16>, vector<8x64xf32> -> vector<8x64xf32>
    %c0_6 = arith.constant 0 : index
    %c1 = arith.constant 1 : index
    %c0_7 = arith.constant 0 : index
    %c0_8 = arith.constant 0 : index
    %5 = vector.load %arg3[%c0_6, %c1, %c0_7, %c0_8] : memref<1x3x32x64xbf16, #tpu.memory_space<vmem>>, vector<1x1x32x64xbf16>
    %6 = vector.shape_cast %5 : vector<1x1x32x64xbf16> to vector<32x64xbf16>
    %cst_9 = arith.constant dense<0.000000e+00> : vector<8x64xf32>
    %7 = tpu.matmul %1, %6, %cst_9 {dimension_numbers = #tpu.dot_dimension_numbers<[1], [0], [0], [1], [0, 0, 1, 1], [], []>} : vector<8x32xbf16>, vector<32x64xbf16>, vector<8x64xf32> -> vector<8x64xf32>
    %c0_10 = arith.constant 0 : index
    %c2 = arith.constant 2 : index
    %c0_11 = arith.constant 0 : index
    %c0_12 = arith.constant 0 : index
    %8 = vector.load %arg3[%c0_10, %c2, %c0_11, %c0_12] : memref<1x3x32x64xbf16, #tpu.memory_space<vmem>>, vector<1x1x32x64xbf16>
    %9 = vector.shape_cast %8 : vector<1x1x32x64xbf16> to vector<32x64xbf16>
    %cst_13 = arith.constant dense<0.000000e+00> : vector<8x64xf32>
    %10 = tpu.matmul %1, %9, %cst_13 {dimension_numbers = #tpu.dot_dimension_numbers<[1], [0], [0], [1], [0, 0, 1, 1], [], []>} : vector<8x32xbf16>, vector<32x64xbf16>, vector<8x64xf32> -> vector<8x64xf32>
    %11 = arith.truncf %4 : vector<8x64xf32> to vector<8x64xbf16>
    %12 = arith.truncf %7 : vector<8x64xf32> to vector<8x64xbf16>
    %cst_14 = arith.constant dense<0.000000e+00> : vector<8x8xf32>
    %13 = tpu.matmul %11, %12, %cst_14 {dimension_numbers = #tpu.dot_dimension_numbers<[1], [1], [0], [0], [0, 0, 1, 0], [], []>} : vector<8x64xbf16>, vector<8x64xbf16>, vector<8x8xf32> -> vector<8x8xf32>
    %cst_15 = arith.constant dense<0xFF800000> : vector<8xf32>
    %14 = vector.multi_reduction <maximumf>, %13, %cst_15 [1] : vector<8x8xf32> to vector<8xf32>
    %15 = vector.shape_cast %14 : vector<8xf32> to vector<8x1xf32>
    %16 = vector.broadcast %15 : vector<8x1xf32> to vector<8x8xf32>
    %17 = arith.subf %13, %16 : vector<8x8xf32>
    %18 = math.exp %17 : vector<8x8xf32>
    %cst_16 = arith.constant dense<0.000000e+00> : vector<8xf32>
    %19 = vector.multi_reduction <add>, %18, %cst_16 [1] : vector<8x8xf32> to vector<8xf32>
    %20 = vector.shape_cast %19 : vector<8xf32> to vector<8x1xf32>
    %21 = tpu.reciprocal %20 {approx = true} : vector<8x1xf32> -> vector<8x1xf32>
    %22 = arith.mulf %20, %21 : vector<8x1xf32>
    %cst_17 = arith.constant 2.000000e+00 : f32
    %23 = vector.broadcast %cst_17 : f32 to vector<8x1xf32>
    %24 = arith.subf %23, %22 : vector<8x1xf32>
    %25 = arith.mulf %21, %24 : vector<8x1xf32>
    %26 = vector.broadcast %25 : vector<8x1xf32> to vector<8x8xf32>
    %27 = arith.mulf %18, %26 : vector<8x8xf32>
    %c0_18 = arith.constant 0 : index
    %c0_19 = arith.constant 0 : index
    %c0_20 = arith.constant 0 : index
    %c0_21 = arith.constant 0 : index
    %28 = vector.load %arg7[%c0_18, %c0_19, %c0_20, %c0_21] : memref<1x1x8x8xf32, #tpu.memory_space<vmem>>, vector<1x1x8x8xf32>
    %29 = vector.shape_cast %28 : vector<1x1x8x8xf32> to vector<8x8xf32>
    %30 = vector.shape_cast %27 : vector<8x8xf32> to vector<1x1x8x8xf32>
    tpu.vector_store %arg7[%c0_18, %c0_19, %c0_20, %c0_21], %30 {strides = array<i32>} : memref<1x1x8x8xf32, #tpu.memory_space<vmem>>, vector<1x1x8x8xf32>,
    %31 = arith.truncf %27 : vector<8x8xf32> to vector<8x8xbf16>
    %32 = arith.truncf %10 : vector<8x64xf32> to vector<8x64xbf16>
    %cst_22 = arith.constant dense<0.000000e+00> : vector<8x64xf32>
    %33 = tpu.matmul %31, %32, %cst_22 {dimension_numbers = #tpu.dot_dimension_numbers<[1], [0], [0], [1], [0, 0, 1, 1], [], []>} : vector<8x8xbf16>, vector<8x64xbf16>, vector<8x64xf32> -> vector<8x64xf32>
    %34 = arith.truncf %33 : vector<8x64xf32> to vector<8x64xbf16>
    %c0_23 = arith.constant 0 : index
    %c0_24 = arith.constant 0 : index
    %c0_25 = arith.constant 0 : index
    %35 = vector.load %arg4[%c0_23, %c0_24, %c0_25] : memref<1x64x32xbf16, #tpu.memory_space<vmem>>, vector<1x64x32xbf16>
    %36 = vector.shape_cast %35 : vector<1x64x32xbf16> to vector<64x32xbf16>
    %cst_26 = arith.constant dense<0.000000e+00> : vector<8x32xf32>
    %37 = tpu.matmul %34, %36, %cst_26 {dimension_numbers = #tpu.dot_dimension_numbers<[1], [0], [0], [1], [0, 0, 1, 1], [], []>} : vector<8x64xbf16>, vector<64x32xbf16>, vector<8x32xf32> -> vector<8x32xf32>
    %c0_i32 = arith.constant 0 : i32
    %38 = arith.cmpi eq, %arg1, %c0_i32 : i32
    %39 = arith.extui %38 : i1 to i32
    %c0_i32_27 = arith.constant 0 : i32
    %40 = arith.cmpi ne, %39, %c0_i32_27 : i32
    scf.if %40 {
      %c0_30 = arith.constant 0 : index
      %c0_31 = arith.constant 0 : index
      %44 = vector.load %arg5[%c0_30, %c0_31] : memref<1x32xf32, #tpu.memory_space<vmem>>, vector<1x32xf32>
      %45 = vector.broadcast %44 : vector<1x32xf32> to vector<8x32xf32>
      %46 = arith.addf %45, %37 : vector<8x32xf32>
      %c0_32 = arith.constant 0 : index
      %c0_33 = arith.constant 0 : index
      %c0_34 = arith.constant 0 : index
      %47 = vector.load %arg6[%c0_32, %c0_33, %c0_34] : memref<1x8x32xf32, #tpu.memory_space<vmem>>, vector<1x8x32xf32>
      %48 = vector.shape_cast %47 : vector<1x8x32xf32> to vector<8x32xf32>
      %49 = vector.shape_cast %46 : vector<8x32xf32> to vector<1x8x32xf32>
      tpu.vector_store %arg6[%c0_32, %c0_33, %c0_34], %49 {strides = array<i32>} : memref<1x8x32xf32, #tpu.memory_space<vmem>>, vector<1x8x32xf32>,
    } else {
    }
    %c0_i32_28 = arith.constant 0 : i32
    %41 = arith.cmpi ne, %arg1, %c0_i32_28 : i32
    %42 = arith.extui %41 : i1 to i32
    %c0_i32_29 = arith.constant 0 : i32
    %43 = arith.cmpi ne, %42, %c0_i32_29 : i32
    scf.if %43 {
      %c0_30 = arith.constant 0 : index
      %c0_31 = arith.constant 0 : index
      %c0_32 = arith.constant 0 : index
      %44 = vector.load %arg6[%c0_30, %c0_31, %c0_32] : memref<1x8x32xf32, #tpu.memory_space<vmem>>, vector<1x8x32xf32>
      %45 = vector.shape_cast %44 : vector<1x8x32xf32> to vector<8x32xf32>
      %46 = arith.addf %45, %37 : vector<8x32xf32>
      %c0_33 = arith.constant 0 : index
      %c0_34 = arith.constant 0 : index
      %c0_35 = arith.constant 0 : index
      %47 = vector.load %arg6[%c0_33, %c0_34, %c0_35] : memref<1x8x32xf32, #tpu.memory_space<vmem>>, vector<1x8x32xf32>
      %48 = vector.shape_cast %47 : vector<1x8x32xf32> to vector<8x32xf32>
      %49 = vector.shape_cast %46 : vector<8x32xf32> to vector<1x8x32xf32>
      tpu.vector_store %arg6[%c0_33, %c0_34, %c0_35], %49 {strides = array<i32>} : memref<1x8x32xf32, #tpu.memory_space<vmem>>, vector<1x8x32xf32>,
    } else {
    }
    return
  }
  func.func @transform_0(%arg0: i32, %arg1: i32) -> (i32, i32, i32) {
    %c0_i32 = arith.constant 0 : i32
    %c0_i32_0 = arith.constant 0 : i32
    %c0_i32_1 = arith.constant 0 : i32
    return %arg0, %c0_i32, %c0_i32_0 : i32, i32, i32
  }
  func.func @transform_1(%arg0: i32, %arg1: i32) -> (i32, i32, i32, i32) {
    %c0_i32 = arith.constant 0 : i32
    %c0_i32_0 = arith.constant 0 : i32
    %c0_i32_1 = arith.constant 0 : i32
    %c0_i32_2 = arith.constant 0 : i32
    return %arg1, %c0_i32, %c0_i32_0, %c0_i32_1 : i32, i32, i32, i32
  }
  func.func @transform_2(%arg0: i32, %arg1: i32) -> (i32, i32, i32) {
    %c0_i32 = arith.constant 0 : i32
    %c0_i32_0 = arith.constant 0 : i32
    %c0_i32_1 = arith.constant 0 : i32
    return %arg1, %c0_i32, %c0_i32_0 : i32, i32, i32
  }
  func.func @transform_3(%arg0: i32, %arg1: i32) -> (i32, i32) {
    %c0_i32 = arith.constant 0 : i32
    %c0_i32_0 = arith.constant 0 : i32
    %c0_i32_1 = arith.constant 0 : i32
    return %c0_i32, %c0_i32_0 : i32, i32
  }
  func.func @transform_4(%arg0: i32, %arg1: i32) -> (i32, i32, i32) {
    %c0_i32 = arith.constant 0 : i32
    %c0_i32_0 = arith.constant 0 : i32
    %c0_i32_1 = arith.constant 0 : i32
    return %arg0, %c0_i32, %c0_i32_0 : i32, i32, i32
  }
  func.func @transform_5(%arg0: i32, %arg1: i32) -> (i32, i32, i32, i32) {
    %c0_i32 = arith.constant 0 : i32
    %c0_i32_0 = arith.constant 0 : i32
    %c0_i32_1 = arith.constant 0 : i32
    return %arg0, %arg1, %c0_i32, %c0_i32_0 : i32, i32, i32, i32
  }
}

</mosaic_0001>

<llo_original>
// kernel: tpu_custom_call.1
$region0: #{tpu_custom_call.1}
  #allocation0 [shape = 'u32[]', space=smem, size = 0x4, offset = 0x4, fixed_abs, tag = 'smem constant byte address 0x4 - core index']
  #allocation1 [shape = 'u32[144,128]{1,0:T(1,128)}', space=vmem, size = 0x12000, scoped, tag = 'internal scratch']
  %s0 = inlined_call_operand.hbm [shape: bf16[2,8,32], index: 0, kind: input, shape index: {}]
  %s1 = inlined_call_operand.vmem [shape: bf16[8,3,32,64], index: 1, kind: input, shape index: {}]
  %s2 = inlined_call_operand.vmem [shape: bf16[8,64,32], index: 2, kind: input, shape index: {}]
  %s3 = inlined_call_operand.vmem [shape: f32[1,32], index: 3, kind: input, shape index: {}]
  %s4 = inlined_call_operand.hbm [shape: f32[2,8,32], index: 4, kind: output, shape index: {0}]
  %s5 = inlined_call_operand.hbm [shape: f32[2,8,8,8], index: 5, kind: output, shape index: {1}]
  %6 = xla_tuple %s4, %s5
  %s7 = sld [smem:[#allocation0]]
  $region69: #{tpu_custom_call.1} parent=0
    _
  %s9 = ssub.s32 1, %s7
  %s10 = scalar_select 0, %s9, %s7
  $region1: #{tpu_custom_call.1} parent=0
    #allocation2 [shape = 'u8[4096]{0}', space=vmem, size = 0x1000, scoped, tag = 'input window, operand 0']
    #allocation3 [shape = 's32[2]{0}', space=sflag, size = 0x8, scoped, tag = 'scoped memory for tpu_custom_call.1']
    #allocation4 [shape = 's32[2]{0}', space=sflag, size = 0x8, scoped, tag = 'scoped memory for tpu_custom_call.1']
    #allocation5 [shape = 'u8[8192]{0}', space=vmem, size = 0x2000, scoped, tag = 'output window, operand 0']
    #allocation6 [shape = 'u8[8192]{0}', space=vmem, size = 0x2000, scoped, tag = 'output window, operand 1']
    #allocation7 [shape = 's32[2]{0}', space=sflag, size = 0x8, scoped, tag = 'scoped memory for tpu_custom_call.1']
    %11 = vsyncpa [#allocation3], 0
    %s12 = scalar_lea.sflag [#allocation3], 1
    %13 = vsyncpa %s12, 0
    %14 = vsyncpa [#allocation4], 0
    %s15 = scalar_lea.sflag [#allocation4], 1
    %16 = vsyncpa %s15, 0
    %17 = vsyncpa [#allocation7], 0
    %s18 = scalar_lea.sflag [#allocation7], 1
    %19 = vsyncpa %s18, 0
    loop: start=0, step=1, limit=18
    $region2: #{tpu_custom_call.1} parent=1 // loop_pre_header
      _
    $region3: #{tpu_custom_call.1} parent=1 // loop_header
      %s21 = sphi 0, %s25
      %p22 = scmp.ge.s32.totalorder %s21, 18
      %s28 = sphi 0, %s40
      %s29 = sphi 0, %s36
      %s30 = sphi 0, %s28
      %s31 = sphi 0, %s29
      %s32 = sphi 0, %s30
      %s33 = sphi 0, %s31
      %s43 = sphi 0, %s45
      %s46 = sphi 0, %s43
      %s47 = sphi 0, %s46
      %s63 = sphi 0, %s47
      %s69 = sphi 0, %s71
      %s72 = sphi 0, %s69
      %s73 = sphi 0, %s72
      %s89 = sphi 0, %s73
      %s95 = sphi 0, %s97
      %s98 = sphi 0, %s95
      %s99 = sphi 0, %s98
      %s115 = sphi 0, %s99
      %s119 = sphi 0, %s119
      %s121 = sphi 0, %s119
      %s122 = sphi 0, %s121
      %s136 = sphi 0, %s122
      %s142 = sphi 0, %s144
      %s145 = sphi 0, %s142
      %s146 = sphi 0, %s145
      %s162 = sphi 0, %s146
      %s170 = sphi 0, %s172
      %s173 = sphi 0, %s170
      %s174 = sphi 0, %s173
      %s190 = sphi 0, %s174
    $region4: #{tpu_custom_call.1} parent=1 // loop_header_branch
      %24 = sbr.rel (%p22) target = $region8
    $region5: #{tpu_custom_call.1} parent=1 // loop_body
      %s26 = ssub.s32 %s21, 1
      %s27 = ssub.s32 %s21, 2
      %s34 = sadd.s32 1, %s29
      %p35 = scmp.ge.s32.totalorder %s34, 8
      %s36 = scalar_select %p35, 0, %s34
      %s37 = sadd.s32 1, %s28
      %s38 = scalar_select %p35, %s37, %s28
      %p39 = scmp.ge.s32.totalorder %s38, 2
      %s40 = scalar_select %p39, 0, %s38
      %s41 = ssub.s32 %s28, %s40
      %p42 = scmp.eq.s32.totalorder %s41, 0
      %s44 = sadd.s32 %s43, 1
      %s45 = scalar_select %p42, %s43, %s44
      %p48 = pneg %p42
      %p49 = scmp.eq.s32.totalorder %s21, 15
      %p50 = por %p48, %p49
      %p51 = scmp.ne.s32.totalorder %s43, %s46
      %p52 = scmp.eq.s32.totalorder %s21, 0
      %p53 = por %p51, %p52
      %p54 = scmp.ne.s32.totalorder %s43, %s46
      %p55 = scmp.eq.s32.totalorder %s26, 15
      %p56 = por %p54, %p55
      %p57 = scmp.ne.s32.totalorder %s46, %s47
      %p58 = scmp.eq.s32.totalorder %s26, 0
      %p59 = por %p57, %p58
      %p60 = scmp.ne.s32.totalorder %s46, %s47
      %p61 = scmp.eq.s32.totalorder %s27, 15
      %p62 = por %p60, %p61
      %p64 = scmp.ne.s32.totalorder %s47, %s63
      %p65 = scmp.eq.s32.totalorder %s27, 0
      %p66 = por %p64, %p65
      %s67 = ssub.s32 %s29, %s36
      %p68 = scmp.eq.s32.totalorder %s67, 0
      %s70 = sadd.s32 %s69, 1
      %s71 = scalar_select %p68, %s69, %s70
      %p74 = pneg %p68
      %p75 = scmp.eq.s32.totalorder %s21, 15
      %p76 = por %p74, %p75
      %p77 = scmp.ne.s32.totalorder %s69, %s72
      %p78 = scmp.eq.s32.totalorder %s21, 0
      %p79 = por %p77, %p78
      %p80 = scmp.ne.s32.totalorder %s69, %s72
      %p81 = scmp.eq.s32.totalorder %s26, 15
      %p82 = por %p80, %p81
      %p83 = scmp.ne.s32.totalorder %s72, %s73
      %p84 = scmp.eq.s32.totalorder %s26, 0
      %p85 = por %p83, %p84
      %p86 = scmp.ne.s32.totalorder %s72, %s73
      %p87 = scmp.eq.s32.totalorder %s27, 15
      %p88 = por %p86, %p87
      %p90 = scmp.ne.s32.totalorder %s73, %s89
      %p91 = scmp.eq.s32.totalorder %s27, 0
      %p92 = por %p90, %p91
      %s93 = ssub.s32 %s29, %s36
      %p94 = scmp.eq.s32.totalorder %s93, 0
      %s96 = sadd.s32 %s95, 1
      %s97 = scalar_select %p94, %s95, %s96
      %p100 = pneg %p94
      %p101 = scmp.eq.s32.totalorder %s21, 15
      %p102 = por %p100, %p101
      %p103 = scmp.ne.s32.totalorder %s95, %s98
      %p104 = scmp.eq.s32.totalorder %s21, 0
      %p105 = por %p103, %p104
      %p106 = scmp.ne.s32.totalorder %s95, %s98
      %p107 = scmp.eq.s32.totalorder %s26, 15
      %p108 = por %p106, %p107
      %p109 = scmp.ne.s32.totalorder %s98, %s99
      %p110 = scmp.eq.s32.totalorder %s26, 0
      %p111 = por %p109, %p110
      %p112 = scmp.ne.s32.totalorder %s98, %s99
      %p113 = scmp.eq.s32.totalorder %s27, 15
      %p114 = por %p112, %p113
      %p116 = scmp.ne.s32.totalorder %s99, %s115
      %p117 = scmp.eq.s32.totalorder %s27, 0
      %p118 = por %p116, %p117
      %s120 = sadd.s32 %s119, 1
      %p123 = scmp.eq.s32.totalorder %s21, 15
      %p124 = scmp.ne.s32.totalorder %s119, %s121
      %p125 = scmp.eq.s32.totalorder %s21, 0
      %p126 = por %p124, %p125
      %p127 = scmp.ne.s32.totalorder %s119, %s121
      %p128 = scmp.eq.s32.totalorder %s26, 15
      %p129 = por %p127, %p128
      %p130 = scmp.ne.s32.totalorder %s121, %s122
      %p131 = scmp.eq.s32.totalorder %s26, 0
      %p132 = por %p130, %p131
      %p133 = scmp.ne.s32.totalorder %s121, %s122
      %p134 = scmp.eq.s32.totalorder %s27, 15
      %p135 = por %p133, %p134
      %p137 = scmp.ne.s32.totalorder %s122, %s136
      %p138 = scmp.eq.s32.totalorder %s27, 0
      %p139 = por %p137, %p138
      %s140 = ssub.s32 %s28, %s40
      %p141 = scmp.eq.s32.totalorder %s140, 0
      %s143 = sadd.s32 %s142, 1
      %s144 = scalar_select %p141, %s142, %s143
      %p147 = pneg %p141
      %p148 = scmp.eq.s32.totalorder %s21, 15
      %p149 = por %p147, %p148
      %p150 = scmp.ne.s32.totalorder %s142, %s145
      %p151 = scmp.eq.s32.totalorder %s21, 0
      %p152 = por %p150, %p151
      %p153 = scmp.ne.s32.totalorder %s142, %s145
      %p154 = scmp.eq.s32.totalorder %s26, 15
      %p155 = por %p153, %p154
      %p156 = scmp.ne.s32.totalorder %s145, %s146
      %p157 = scmp.eq.s32.totalorder %s26, 0
      %p158 = por %p156, %p157
      %p159 = scmp.ne.s32.totalorder %s145, %s146
      %p160 = scmp.eq.s32.totalorder %s27, 15
      %p161 = por %p159, %p160
      %p163 = scmp.ne.s32.totalorder %s146, %s162
      %p164 = scmp.eq.s32.totalorder %s27, 0
      %p165 = por %p163, %p164
      %s166 = ssub.s32 %s28, %s40
      %s167 = ssub.s32 %s29, %s36
      %s168 = sor.u32 %s166, %s167
      %p169 = scmp.eq.s32.totalorder %s168, 0
      %s171 = sadd.s32 %s170, 1
      %s172 = scalar_select %p169, %s170, %s171
      %p175 = pneg %p169
      %p176 = scmp.eq.s32.totalorder %s21, 15
      %p177 = por %p175, %p176
      %p178 = scmp.ne.s32.totalorder %s170, %s173
      %p179 = scmp.eq.s32.totalorder %s21, 0
      %p180 = por %p178, %p179
      %p181 = scmp.ne.s32.totalorder %s170, %s173
      %p182 = scmp.eq.s32.totalorder %s26, 15
      %p183 = por %p181, %p182
      %p184 = scmp.ne.s32.totalorder %s173, %s174
      %p185 = scmp.eq.s32.totalorder %s26, 0
      %p186 = por %p184, %p185
      %p187 = scmp.ne.s32.totalorder %s173, %s174
      %p188 = scmp.eq.s32.totalorder %s27, 15
      %p189 = por %p187, %p188
      %p191 = scmp.ne.s32.totalorder %s174, %s190
      %p192 = scmp.eq.s32.totalorder %s27, 0
      %p193 = por %p191, %p192
      %p194 = scmp.le.s32.totalorder 1, %s21
      %p195 = scmp.lt.s32.totalorder %s21, 17
      %p196 = pnand %p194, %p195
      %p197 = pneg %p196
      // Predicated region
      $region9: #{tpu_custom_call.1} parent=5 // pred_check
        _
      $region10: #{tpu_custom_call.1} parent=5 // pred_check_branch
        %199 = sbr.rel (%p196) target = $region12
      $region11: #{tpu_custom_call.1} parent=5 // pred_region
        %s200 = ssub.s32 %s21, 1
        // Predicated region
        $region13: #{tpu_custom_call.1} parent=11 // pred_check
          %p201 = pneg %p132
        $region14: #{tpu_custom_call.1} parent=11 // pred_check_branch
          %203 = sbr.rel (%p201) target = $region16
        $region15: #{tpu_custom_call.1} parent=11 // pred_region
          _
        $region16: #{tpu_custom_call.1} parent=11 // pred_fallthru
          _
      $region12: #{tpu_custom_call.1} parent=5 // pred_fallthru
        _
      %p204 = scmp.lt.s32.totalorder %s21, 16
      // Predicated region
      $region17: #{tpu_custom_call.1} parent=5 // pred_check
        %p205 = pneg %p204
      $region18: #{tpu_custom_call.1} parent=5 // pred_check_branch
        %207 = sbr.rel (%p205) target = $region20
      $region19: #{tpu_custom_call.1} parent=5 // pred_region
        // Predicated region
        $region21: #{tpu_custom_call.1} parent=19 // pred_check
          %p208 = pneg %p53
        $region22: #{tpu_custom_call.1} parent=19 // pred_check_branch
          %210 = sbr.rel (%p208) target = $region24
        $region23: #{tpu_custom_call.1} parent=19 // pred_region
          %s211 = sand.u32 %s43, 1
          %s212 = scalar_lea.sflag [#allocation3], %s211
          %s213 = sand.u32 %s43, 1
          %s214 = smul.addr %s213, 4
          %s215 = scalar_lea.vmem [#allocation2], %s214
          %s217 = ssub.s32 64, 64
          %218 = vsyncadd %s212, %s217
          %s219 = smul.addr %s28, 64
          %s220 = scalar_lea.hbm %s0, %s219
          %s222 = sshll.u32 %s215, 4
          %s223 = int_to_ptr.vmem [resolvable:$true] %s222
          %225 = dma.hbm_to_vmem [thread:$0]  %s220, 64, %s223, %s212
        $region24: #{tpu_custom_call.1} parent=19 // pred_fallthru
          _
        // Predicated region
        $region25: #{tpu_custom_call.1} parent=19 // pred_check
          %p226 = pneg %p79
        $region26: #{tpu_custom_call.1} parent=19 // pred_check_branch
          %228 = sbr.rel (%p226) target = $region28
        $region27: #{tpu_custom_call.1} parent=19 // pred_region
          %p229 = scmp.lt.s32.totalorder %s29, 7
          %s230 = scalar_select %p229, %s29, 7
          %s231 = smul.addr %s230, 12
          %s232 = smul.addr %s231, 4
          %s233 = scalar_lea.vmem %s1, %s232
        $region28: #{tpu_custom_call.1} parent=19 // pred_fallthru
          _
        // Predicated region
        $region29: #{tpu_custom_call.1} parent=19 // pred_check
          %p234 = pneg %p105
        $region30: #{tpu_custom_call.1} parent=19 // pred_check_branch
          %236 = sbr.rel (%p234) target = $region32
        $region31: #{tpu_custom_call.1} parent=19 // pred_region
          %p237 = scmp.lt.s32.totalorder %s29, 7
          %s238 = scalar_select %p237, %s29, 7
          %s239 = smul.addr %s238, 8
          %s240 = smul.addr %s239, 4
          %s241 = scalar_lea.vmem %s2, %s240
        $region32: #{tpu_custom_call.1} parent=19 // pred_fallthru
          _
      $region20: #{tpu_custom_call.1} parent=5 // pred_fallthru
        _
      %p242 = scmp.le.s32.totalorder 1, %s21
      %p243 = scmp.lt.s32.totalorder %s21, 17
      %p244 = pnand %p242, %p243
      %p245 = pneg %p244
      // Predicated region
      $region33: #{tpu_custom_call.1} parent=5 // pred_check
        _
      $region34: #{tpu_custom_call.1} parent=5 // pred_check_branch
        %247 = sbr.rel (%p244) target = $region36
      $region35: #{tpu_custom_call.1} parent=5 // pred_region
        %s248 = ssub.s32 %s21, 1
        %s249 = sand.u32 %s46, 1
        %s250 = scalar_lea.sflag [#allocation3], %s249
        %s251 = sand.u32 %s46, 1
        %s252 = smul.addr %s251, 4
        %s253 = scalar_lea.vmem [#allocation2], %s252
        // Predicated region
        $region37: #{tpu_custom_call.1} parent=35 // pred_check
          %p254 = pneg %p59
        $region38: #{tpu_custom_call.1} parent=35 // pred_check_branch
          %256 = sbr.rel (%p254) target = $region40
        $region39: #{tpu_custom_call.1} parent=35 // pred_region
          %257 = dma.done %s250, 64
        $region40: #{tpu_custom_call.1} parent=35 // pred_fallthru
          _
        %s258 = sand.u32 %s46, 1
        %s259 = scalar_lea.sflag [#allocation3], %s258
        %s260 = sand.u32 %s46, 1
        %s261 = smul.addr %s260, 4
        %s262 = scalar_lea.vmem [#allocation2], %s261
        %p263 = pneg %p59
        %p264 = pneg %p56
        %p265 = scmp.lt.s32.totalorder %s31, 7
        %s266 = scalar_select %p265, %s31, 7
        %s267 = smul.addr %s266, 12
        %s268 = smul.addr %s267, 4
        %s269 = scalar_lea.vmem %s1, %s268
        %p270 = pneg %p85
        %p271 = pneg %p82
        %p272 = scmp.lt.s32.totalorder %s31, 7
        %s273 = scalar_select %p272, %s31, 7
        %s274 = smul.addr %s273, 8
        %s275 = smul.addr %s274, 4
        %s276 = scalar_lea.vmem %s2, %s275
        %p277 = pneg %p111
        %p278 = pneg %p108
        %p279 = pneg %p132
        %p280 = pneg %p129
        %p281 = pneg %p158
        %p282 = pneg %p155
        %s283 = sand.u32 %s145, 1
        %s284 = scalar_lea.sflag [#allocation4], %s283
        %s285 = sand.u32 %s145, 1
        %s286 = smul.addr %s285, 8
        %s287 = scalar_lea.vmem [#allocation5], %s286
        %p288 = pneg %p186
        %p289 = pneg %p183
        %s290 = sand.u32 %s173, 1
        %s291 = scalar_lea.sflag [#allocation7], %s290
        %s292 = sand.u32 %s173, 1
        %s293 = smul.addr %s292, 8
        %s294 = scalar_lea.vmem [#allocation6], %s293
        %p295 = scmp.lt.s32.totalorder %s31, 7
        %s296 = scalar_select %p295, %s31, 7
        %s297 = smul.addr %s296, 12
        %s298 = smul.addr %s297, 4
        %s299 = scalar_lea.vmem %s1, %s298
        %p300 = scmp.lt.s32.totalorder %s31, 7
        %s301 = scalar_select %p300, %s31, 7
        %s302 = smul.addr %s301, 8
        %s303 = smul.addr %s302, 4
        %s304 = scalar_lea.vmem %s2, %s303
        %v306 = vld [vmem:[%s253] sm:$0xf]
        %v307 = vld [vmem:[%s299] sm:$0xf]
        %v308 = vld [vmem:[%s299 + $0x4] sm:$0xf]
        %v309 = vld [vmem:[%s299 + $0x8] sm:$0xf]
        %v310 = vld [vmem:[%s299 + $0xc] sm:$0xf]
        %v315 = vunpack.c.l.b16 %v307
        %v316 = vunpack.c.l.b16 %v308
        %v317 = vunpack.c.l.b16 %v309
        %v318 = vunpack.c.l.b16 %v310
        %v319 = vpack.c.b16 %v316, %v315
        %v320 = vpack.c.b16 %v318, %v317
        %vm323 = vcmask 261120
        %v325 = vsel %vm323, %v306, 0
        %327 = vmatprep.subr.bf16.mxu0 0
        %328 = vmatpush1.bf16.msra.mxu0 %v319
        %329 = vmatprep.subr.bf16.mxu0 0
        %330 = vmatpush1.bf16.msra.mxu0 %v320
        %331 = vmatprep.subr.bf16.mxu0 0
        %332 = vmatpush1.bf16.msra.mxu0 0
        %333 = vmatprep.subr.bf16.mxu0 0
        %334 = vmatpush1.bf16.msra.mxu0 0
        %335 = vmatprep.subr.bf16.mxu0 0
        %336 = vmatpush1.bf16.msra.mxu0 0
        %337 = vmatprep.subr.bf16.mxu0 0
        %338 = vmatpush1.bf16.msra.mxu0 0
        %339 = vmatprep.subr.bf16.mxu0 0
        %340 = vmatpush1.bf16.msra.mxu0 0
        %341 = vmatprep.subr.bf16.mxu0 0
        %342 = vmatpush1.bf16.msra.mxu0 0
        %343 = vmatprep.subr.bf16.mxu0 0
        %344 = vmatpush1.bf16.msra.mxu0 0
        %345 = vmatprep.subr.bf16.mxu0 0
        %346 = vmatpush1.bf16.msra.mxu0 0
        %347 = vmatprep.subr.bf16.mxu0 0
        %348 = vmatpush1.bf16.msra.mxu0 0
        %349 = vmatprep.subr.bf16.mxu0 0
        %350 = vmatpush1.bf16.msra.mxu0 0
        %351 = vmatprep.subr.bf16.mxu0 0
        %352 = vmatpush1.bf16.msra.mxu0 0
        %353 = vmatprep.subr.bf16.mxu0 0
        %354 = vmatpush1.bf16.msra.mxu0 0
        %355 = vmatprep.subr.bf16.mxu0 0
        %356 = vmatpush1.bf16.msra.mxu0 0
        %357 = vmatprep.subr.bf16.mxu0 0
        %358 = vmatpush1.bf16.msra.mxu0 0
        %359 = vmatprep.mubr.bf16.mxu0 0
        %360 = vmatmul.mubr.bf16.gmra.mrb[0].mxu0 %v325
        %v361 = vpop.f32.mrb[0].mxu0
        %v362 = vadd.f32 0.0, %v361
        %v363 = vpop.f32.mrb[0].mxu0
        %v364 = vpop.f32.mrb[0].mxu0
        %v365 = vpop.f32.mrb[0].mxu0
        %366 = vdwg.mxu0
        %s367 = scalar_lea.vmem %s299, 16
        %v368 = vld [vmem:[%s367] sm:$0xf]
        %v369 = vld [vmem:[%s367 + $0x4] sm:$0xf]
        %v370 = vld [vmem:[%s367 + $0x8] sm:$0xf]
        %v371 = vld [vmem:[%s367 + $0xc] sm:$0xf]
        %v376 = vunpack.c.l.b16 %v368
        %v377 = vunpack.c.l.b16 %v369
        %v378 = vunpack.c.l.b16 %v370
        %v379 = vunpack.c.l.b16 %v371
        %v380 = vpack.c.b16 %v377, %v376
        %v381 = vpack.c.b16 %v379, %v378
        %384 = vmatprep.subr.bf16.mxu0 0
        %385 = vmatpush1.bf16.msra.mxu0 %v380
        %386 = vmatprep.subr.bf16.mxu0 0
        %387 = vmatpush1.bf16.msra.mxu0 %v381
        %388 = vmatprep.subr.bf16.mxu0 0
        %389 = vmatpush1.bf16.msra.mxu0 0
        %390 = vmatprep.subr.bf16.mxu0 0
        %391 = vmatpush1.bf16.msra.mxu0 0
        %392 = vmatprep.subr.bf16.mxu0 0
        %393 = vmatpush1.bf16.msra.mxu0 0
        %394 = vmatprep.subr.bf16.mxu0 0
        %395 = vmatpush1.bf16.msra.mxu0 0
        %396 = vmatprep.subr.bf16.mxu0 0
        %397 = vmatpush1.bf16.msra.mxu0 0
        %398 = vmatprep.subr.bf16.mxu0 0
        %399 = vmatpush1.bf16.msra.mxu0 0
        %400 = vmatprep.subr.bf16.mxu0 0
        %401 = vmatpush1.bf16.msra.mxu0 0
        %402 = vmatprep.subr.bf16.mxu0 0
        %403 = vmatpush1.bf16.msra.mxu0 0
        %404 = vmatprep.subr.bf16.mxu0 0
        %405 = vmatpush1.bf16.msra.mxu0 0
        %406 = vmatprep.subr.bf16.mxu0 0
        %407 = vmatpush1.bf16.msra.mxu0 0
        %408 = vmatprep.subr.bf16.mxu0 0
        %409 = vmatpush1.bf16.msra.mxu0 0
        %410 = vmatprep.subr.bf16.mxu0 0
        %411 = vmatpush1.bf16.msra.mxu0 0
        %412 = vmatprep.subr.bf16.mxu0 0
        %413 = vmatpush1.bf16.msra.mxu0 0
        %414 = vmatprep.subr.bf16.mxu0 0
        %415 = vmatpush1.bf16.msra.mxu0 0
        %416 = vmatprep.mubr.bf16.mxu0 0
        %417 = vmatmul.mubr.bf16.gmra.mrb[0].mxu0 %v325
        %v418 = vpop.f32.mrb[0].mxu0
        %v419 = vadd.f32 0.0, %v418
        %v420 = vpop.f32.mrb[0].mxu0
        %v421 = vpop.f32.mrb[0].mxu0
        %v422 = vpop.f32.mrb[0].mxu0
        %423 = vdwg.mxu0
        %s424 = scalar_lea.vmem %s299, 32
        %v425 = vld [vmem:[%s424] sm:$0xf]
        %v426 = vld [vmem:[%s424 + $0x4] sm:$0xf]
        %v427 = vld [vmem:[%s424 + $0x8] sm:$0xf]
        %v428 = vld [vmem:[%s424 + $0xc] sm:$0xf]
        %v433 = vunpack.c.l.b16 %v425
        %v434 = vunpack.c.l.b16 %v426
        %v435 = vunpack.c.l.b16 %v427
        %v436 = vunpack.c.l.b16 %v428
        %v437 = vpack.c.b16 %v434, %v433
        %v438 = vpack.c.b16 %v436, %v435
        %441 = vmatprep.subr.bf16.mxu0 0
        %442 = vmatpush1.bf16.msra.mxu0 %v437
        %443 = vmatprep.subr.bf16.mxu0 0
        %444 = vmatpush1.bf16.msra.mxu0 %v438
        %445 = vmatprep.subr.bf16.mxu0 0
        %446 = vmatpush1.bf16.msra.mxu0 0
        %447 = vmatprep.subr.bf16.mxu0 0
        %448 = vmatpush1.bf16.msra.mxu0 0
        %449 = vmatprep.subr.bf16.mxu0 0
        %450 = vmatpush1.bf16.msra.mxu0 0
        %451 = vmatprep.subr.bf16.mxu0 0
        %452 = vmatpush1.bf16.msra.mxu0 0
        %453 = vmatprep.subr.bf16.mxu0 0
        %454 = vmatpush1.bf16.msra.mxu0 0
        %455 = vmatprep.subr.bf16.mxu0 0
        %456 = vmatpush1.bf16.msra.mxu0 0
        %457 = vmatprep.subr.bf16.mxu0 0
        %458 = vmatpush1.bf16.msra.mxu0 0
        %459 = vmatprep.subr.bf16.mxu0 0
        %460 = vmatpush1.bf16.msra.mxu0 0
        %461 = vmatprep.subr.bf16.mxu0 0
        %462 = vmatpush1.bf16.msra.mxu0 0
        %463 = vmatprep.subr.bf16.mxu0 0
        %464 = vmatpush1.bf16.msra.mxu0 0
        %465 = vmatprep.subr.bf16.mxu0 0
        %466 = vmatpush1.bf16.msra.mxu0 0
        %467 = vmatprep.subr.bf16.mxu0 0
        %468 = vmatpush1.bf16.msra.mxu0 0
        %469 = vmatprep.subr.bf16.mxu0 0
        %470 = vmatpush1.bf16.msra.mxu0 0
        %471 = vmatprep.subr.bf16.mxu0 0
        %472 = vmatpush1.bf16.msra.mxu0 0
        %473 = vmatprep.mubr.bf16.mxu0 0
        %474 = vmatmul.mubr.bf16.gmra.mrb[0].mxu0 %v325
        %v475 = vpop.f32.mrb[0].mxu0
        %v476 = vadd.f32 0.0, %v475
        %v477 = vpop.f32.mrb[0].mxu0
        %v478 = vpop.f32.mrb[0].mxu0
        %v479 = vpop.f32.mrb[0].mxu0
        %480 = vdwg.mxu0
        %v481 = vpack.c.bf16 %v362, %v362
        %v482 = vpack.c.bf16 %v419, %v419
        %vm483 = vcmask 523264
        %v485 = vsel %vm483, %v481, 0
        %v488 = vsel %vm483, %v482, 0
        %490 = vmatprep.subr.bf16.mxu0 0
        %491 = vmatpush1.bf16.xpose.msra.mxu0 %v488
        %492 = vmatprep.subr.bf16.mxu0 0
        %493 = vmatpush1.bf16.xpose.msra.mxu0 0
        %494 = vmatprep.subr.bf16.mxu0 0
        %495 = vmatpush1.bf16.xpose.msra.mxu0 0
        %496 = vmatprep.subr.bf16.mxu0 0
        %497 = vmatpush1.bf16.xpose.msra.mxu0 0
        %498 = vmatprep.subr.bf16.mxu0 0
        %499 = vmatpush1.bf16.xpose.msra.mxu0 0
        %500 = vmatprep.subr.bf16.mxu0 0
        %501 = vmatpush1.bf16.xpose.msra.mxu0 0
        %502 = vmatprep.subr.bf16.mxu0 0
        %503 = vmatpush1.bf16.xpose.msra.mxu0 0
        %504 = vmatprep.subr.bf16.mxu0 0
        %505 = vmatpush1.bf16.xpose.msra.mxu0 0
        %506 = vmatprep.subr.bf16.mxu0 0
        %507 = vmatpush1.bf16.xpose.msra.mxu0 0
        %508 = vmatprep.subr.bf16.mxu0 0
        %509 = vmatpush1.bf16.xpose.msra.mxu0 0
        %510 = vmatprep.subr.bf16.mxu0 0
        %511 = vmatpush1.bf16.xpose.msra.mxu0 0
        %512 = vmatprep.subr.bf16.mxu0 0
        %513 = vmatpush1.bf16.xpose.msra.mxu0 0
        %514 = vmatprep.subr.bf16.mxu0 0
        %515 = vmatpush1.bf16.xpose.msra.mxu0 0
        %516 = vmatprep.subr.bf16.mxu0 0
        %517 = vmatpush1.bf16.xpose.msra.mxu0 0
        %518 = vmatprep.subr.bf16.mxu0 0
        %519 = vmatpush1.bf16.xpose.msra.mxu0 0
        %520 = vmatprep.subr.bf16.mxu0 0
        %521 = vmatpush1.bf16.xpose.msra.mxu0 0
        %522 = vmatprep.mubr.bf16.mxu0 0
        %523 = vmatmul.mubr.bf16.gmra.mrb[0].mxu0 %v485
        %v524 = vpop.f32.mrb[0].mxu0
        %v525 = vadd.f32 0.0, %v524
        %v526 = vpop.f32.mrb[0].mxu0
        %v527 = vpop.f32.mrb[0].mxu0
        %v528 = vpop.f32.mrb[0].mxu0
        %529 = vdwg.mxu0
        %vm530 = vcmask 64512
        %v531 = vsel %vm530, %v525, -inf
        %532 = vmax.xlane.f32.xlu0 %v531
        %v533 = vpop.xlane.xlu0 %532
        %v534 = vsub.f32 %v525, %v533
        %v535 = vmul.f32 %v534, 1.442695
        %v536 = vpow.pop %v535
        %v537 = vsel %vm530, %v536, 0.0
        %538 = vadd.xlane.f32.xlu0 %v537
        %v539 = vpop.xlane.xlu0 %538
        %v540 = vrcp.pop %v539
        %v541 = vmul.f32 %v539, %v540
        %v542 = vsub.f32 2.0, %v541
        %v543 = vmul.f32 %v540, %v542
        %v544 = vmul.f32 %v536, %v543
        %545 = vst.msk [vmem:[%s294] sm:$0xff] %vm530, %v544
        %v546 = vpack.c.bf16 %v544, %v544
        %v547 = vpack.c.bf16 %v476, %v476
        %v549 = vsel %vm530, %v546, 0
        %vm551 = vcmask 1043456
        %v553 = vsel %vm551, %v547, 0
        %555 = vmatprep.subr.bf16.mxu0 0
        %556 = vmatpush1.bf16.msra.mxu0 %v553
        %557 = vmatprep.subr.bf16.mxu0 0
        %558 = vmatpush1.bf16.msra.mxu0 0
        %559 = vmatprep.subr.bf16.mxu0 0
        %560 = vmatpush1.bf16.msra.mxu0 0
        %561 = vmatprep.subr.bf16.mxu0 0
        %562 = vmatpush1.bf16.msra.mxu0 0
        %563 = vmatprep.subr.bf16.mxu0 0
        %564 = vmatpush1.bf16.msra.mxu0 0
        %565 = vmatprep.subr.bf16.mxu0 0
        %566 = vmatpush1.bf16.msra.mxu0 0
        %567 = vmatprep.subr.bf16.mxu0 0
        %568 = vmatpush1.bf16.msra.mxu0 0
        %569 = vmatprep.subr.bf16.mxu0 0
        %570 = vmatpush1.bf16.msra.mxu0 0
        %571 = vmatprep.subr.bf16.mxu0 0
        %572 = vmatpush1.bf16.msra.mxu0 0
        %573 = vmatprep.subr.bf16.mxu0 0
        %574 = vmatpush1.bf16.msra.mxu0 0
        %575 = vmatprep.subr.bf16.mxu0 0
        %576 = vmatpush1.bf16.msra.mxu0 0
        %577 = vmatprep.subr.bf16.mxu0 0
        %578 = vmatpush1.bf16.msra.mxu0 0
        %579 = vmatprep.subr.bf16.mxu0 0
        %580 = vmatpush1.bf16.msra.mxu0 0
        %581 = vmatprep.subr.bf16.mxu0 0
        %582 = vmatpush1.bf16.msra.mxu0 0
        %583 = vmatprep.subr.bf16.mxu0 0
        %584 = vmatpush1.bf16.msra.mxu0 0
        %585 = vmatprep.subr.bf16.mxu0 0
        %586 = vmatpush1.bf16.msra.mxu0 0
        %587 = vmatprep.mubr.bf16.mxu0 0
        %588 = vmatmul.mubr.bf16.gmra.mrb[0].mxu0 %v549
        %v589 = vpop.f32.mrb[0].mxu0
        %v590 = vadd.f32 0.0, %v589
        %v591 = vpop.f32.mrb[0].mxu0
        %v592 = vpop.f32.mrb[0].mxu0
        %v593 = vpop.f32.mrb[0].mxu0
        %594 = vdwg.mxu0
        %v595 = vpack.c.bf16 %v590, %v590
        %v596 = vld [vmem:[%s304] sm:$0xf]
        %v597 = vld [vmem:[%s304 + $0x4] sm:$0xf]
        %v598 = vld [vmem:[%s304 + $0x8] sm:$0xf]
        %v599 = vld [vmem:[%s304 + $0xc] sm:$0xf]
        %v600 = vld [vmem:[%s304 + $0x10] sm:$0xf]
        %v601 = vld [vmem:[%s304 + $0x14] sm:$0xf]
        %v602 = vld [vmem:[%s304 + $0x18] sm:$0xf]
        %v603 = vld [vmem:[%s304 + $0x1c] sm:$0xf]
        %v612 = vunpack.c.l.b16 %v596
        %v613 = vunpack.c.l.b16 %v597
        %v614 = vunpack.c.l.b16 %v598
        %v615 = vunpack.c.l.b16 %v599
        %v616 = vunpack.c.l.b16 %v600
        %v617 = vunpack.c.l.b16 %v601
        %v618 = vunpack.c.l.b16 %v602
        %v619 = vunpack.c.l.b16 %v603
        %v620 = vpack.c.b16 %v613, %v612
        %v621 = vpack.c.b16 %v615, %v614
        %v622 = vpack.c.b16 %v617, %v616
        %v623 = vpack.c.b16 %v619, %v618
        %v629 = vsel %vm483, %v595, 0
        %631 = vmatprep.subr.bf16.mxu0 0
        %632 = vmatpush1.bf16.msra.mxu0 %v620
        %633 = vmatprep.subr.bf16.mxu0 0
        %634 = vmatpush1.bf16.msra.mxu0 %v621
        %635 = vmatprep.subr.bf16.mxu0 0
        %636 = vmatpush1.bf16.msra.mxu0 %v622
        %637 = vmatprep.subr.bf16.mxu0 0
        %638 = vmatpush1.bf16.msra.mxu0 %v623
        %639 = vmatprep.subr.bf16.mxu0 0
        %640 = vmatpush1.bf16.msra.mxu0 0
        %641 = vmatprep.subr.bf16.mxu0 0
        %642 = vmatpush1.bf16.msra.mxu0 0
        %643 = vmatprep.subr.bf16.mxu0 0
        %644 = vmatpush1.bf16.msra.mxu0 0
        %645 = vmatprep.subr.bf16.mxu0 0
        %646 = vmatpush1.bf16.msra.mxu0 0
        %647 = vmatprep.subr.bf16.mxu0 0
        %648 = vmatpush1.bf16.msra.mxu0 0
        %649 = vmatprep.subr.bf16.mxu0 0
        %650 = vmatpush1.bf16.msra.mxu0 0
        %651 = vmatprep.subr.bf16.mxu0 0
        %652 = vmatpush1.bf16.msra.mxu0 0
        %653 = vmatprep.subr.bf16.mxu0 0
        %654 = vmatpush1.bf16.msra.mxu0 0
        %655 = vmatprep.subr.bf16.mxu0 0
        %656 = vmatpush1.bf16.msra.mxu0 0
        %657 = vmatprep.subr.bf16.mxu0 0
        %658 = vmatpush1.bf16.msra.mxu0 0
        %659 = vmatprep.subr.bf16.mxu0 0
        %660 = vmatpush1.bf16.msra.mxu0 0
        %661 = vmatprep.subr.bf16.mxu0 0
        %662 = vmatpush1.bf16.msra.mxu0 0
        %663 = vmatprep.mubr.bf16.mxu0 0
        %664 = vmatmul.mubr.bf16.gmra.mrb[0].mxu0 %v629
        %v665 = vpop.f32.mrb[0].mxu0
        %v666 = vadd.f32 0.0, %v665
        %v667 = vpop.f32.mrb[0].mxu0
        %v668 = vpop.f32.mrb[0].mxu0
        %v669 = vpop.f32.mrb[0].mxu0
        %670 = vdwg.mxu0
        %p671 = scmp.eq.s32.totalorder %s31, 0
        // Predicated region
        $region41: #{tpu_custom_call.1} parent=35 // pred_check
          %p672 = pneg %p671
        $region42: #{tpu_custom_call.1} parent=35 // pred_check_branch
          %674 = sbr.rel (%p672) target = $region44
        $region43: #{tpu_custom_call.1} parent=35 // pred_region
          %v675 = vld [vmem:[%s3] sm:$0x1]
          %v677 = vlaneseq
          %v678 = vshrl.u32 %v677, 7
          %v679 = vsub.s32 0, %v678
          %v680 = vrot.slane %v675, %v679
          %v682 = vadd.f32 %v680, %v666
          %683 = vst.msk [vmem:[%s287] sm:$0xff] %vm323, %v682
        $region44: #{tpu_custom_call.1} parent=35 // pred_fallthru
          _
        %p684 = scmp.ne.s32.totalorder %s31, 0
        // Predicated region
        $region45: #{tpu_custom_call.1} parent=35 // pred_check
          %p685 = pneg %p684
        $region46: #{tpu_custom_call.1} parent=35 // pred_check_branch
          %687 = sbr.rel (%p685) target = $region48
        $region47: #{tpu_custom_call.1} parent=35 // pred_region
          %v688 = vld [vmem:[%s287] sm:$0xff]
          %v689 = vadd.f32 %v688, %v666
          %690 = vst.msk [vmem:[%s287] sm:$0xff] %vm323, %v689
        $region48: #{tpu_custom_call.1} parent=35 // pred_fallthru
          _
        %s691 = sand.u32 %s145, 1
        %s692 = scalar_lea.sflag [#allocation4], %s691
        %s693 = sand.u32 %s145, 1
        %s694 = smul.addr %s693, 8
        %s695 = scalar_lea.vmem [#allocation5], %s694
        %s696 = sand.u32 %s173, 1
        %s697 = scalar_lea.sflag [#allocation7], %s696
        %s698 = sand.u32 %s173, 1
        %s699 = smul.addr %s698, 8
        %s700 = scalar_lea.vmem [#allocation6], %s699
        // Predicated region
        $region49: #{tpu_custom_call.1} parent=35 // pred_check
          %p701 = pneg %p155
        $region50: #{tpu_custom_call.1} parent=35 // pred_check_branch
          %703 = sbr.rel (%p701) target = $region52
        $region51: #{tpu_custom_call.1} parent=35 // pred_region
          %s705 = ssub.s32 128, 128
          %706 = vsyncadd %s692, %s705
          %s707 = smul.addr %s30, 128
          %s708 = scalar_lea.hbm %s4, %s707
          %s710 = sshll.u32 %s695, 4
          %s711 = int_to_ptr.vmem [resolvable:$true] %s710
          %713 = dma.vmem_to_hbm [thread:$0]  %s711, 128, %s708, %s692
        $region52: #{tpu_custom_call.1} parent=35 // pred_fallthru
          _
        // Predicated region
        $region53: #{tpu_custom_call.1} parent=35 // pred_check
          %p714 = pneg %p183
        $region54: #{tpu_custom_call.1} parent=35 // pred_check_branch
          %716 = sbr.rel (%p714) target = $region56
        $region55: #{tpu_custom_call.1} parent=35 // pred_region
          %s718 = ssub.s32 128, 128
          %719 = vsyncadd %s697, %s718
          %s720 = smul.addr %s30, 8
          %s721 = sadd.s32 %s31, %s720
          %s722 = smul.addr %s721, 128
          %s723 = scalar_lea.hbm %s5, %s722
          %s725 = sshll.u32 %s700, 4
          %s726 = int_to_ptr.vmem [resolvable:$true] %s725
          %728 = dma.vmem_to_hbm [thread:$0]  %s726, 128, %s723, %s697
        $region56: #{tpu_custom_call.1} parent=35 // pred_fallthru
          _
      $region36: #{tpu_custom_call.1} parent=5 // pred_fallthru
        _
      %p729 = scmp.le.s32.totalorder 2, %s21
      // Predicated region
      $region57: #{tpu_custom_call.1} parent=5 // pred_check
        %p730 = pneg %p729
      $region58: #{tpu_custom_call.1} parent=5 // pred_check_branch
        %732 = sbr.rel (%p730) target = $region60
      $region59: #{tpu_custom_call.1} parent=5 // pred_region
        %s733 = ssub.s32 %s21, 2
        // Predicated region
        $region61: #{tpu_custom_call.1} parent=59 // pred_check
          %p734 = pneg %p161
        $region62: #{tpu_custom_call.1} parent=59 // pred_check_branch
          %736 = sbr.rel (%p734) target = $region64
        $region63: #{tpu_custom_call.1} parent=59 // pred_region
          %s737 = sand.u32 %s146, 1
          %s738 = scalar_lea.sflag [#allocation4], %s737
          %s739 = sand.u32 %s146, 1
          %s740 = smul.addr %s739, 8
          %s741 = scalar_lea.vmem [#allocation5], %s740
          %742 = dma.done %s738, 128
        $region64: #{tpu_custom_call.1} parent=59 // pred_fallthru
          _
        // Predicated region
        $region65: #{tpu_custom_call.1} parent=59 // pred_check
          %p743 = pneg %p189
        $region66: #{tpu_custom_call.1} parent=59 // pred_check_branch
          %745 = sbr.rel (%p743) target = $region68
        $region67: #{tpu_custom_call.1} parent=59 // pred_region
          %s746 = sand.u32 %s174, 1
          %s747 = scalar_lea.sflag [#allocation7], %s746
          %s748 = sand.u32 %s174, 1
          %s749 = smul.addr %s748, 8
          %s750 = scalar_lea.vmem [#allocation6], %s749
          %751 = dma.done %s747, 128
        $region68: #{tpu_custom_call.1} parent=59 // pred_fallthru
          _
      $region60: #{tpu_custom_call.1} parent=5 // pred_fallthru
        _
    $region6: #{tpu_custom_call.1} parent=1 // loop_footer
      %s25 = sadd.s32 1, %s21
    $region7: #{tpu_custom_call.1} parent=1 // loop_footer_branch
      %20 = sbr.rel target = $region3
    $region8: #{tpu_custom_call.1} parent=1 // loop_exit
      _
    %752 = vsyncpa [#allocation3], 1
    %s753 = scalar_lea.sflag [#allocation3], 1
    %754 = vsyncpa %s753, 1
    %755 = vsyncpa [#allocation4], 1
    %s756 = scalar_lea.sflag [#allocation4], 1
    %757 = vsyncpa %s756, 1
    %758 = vsyncpa [#allocation7], 1
    %s759 = scalar_lea.sflag [#allocation7], 1
    %760 = vsyncpa %s759, 1

</llo_original>
